<compile_context>
chip_gen: v5e
topology: v5e:2x2
jax: 0.10.0
libtpu: 0.0.40
codegen_flags: <defaults>
</compile_context>

<pallas_src>
import jax
import jax.numpy as jnp
from jax.experimental import pallas as pl
from jax.experimental.pallas import tpu as pltpu

IN_SIZE = 28 * 28
OUT_SIZE = 10
LANE = 128
SUBLANE = 8
BLOCK_B = 128            # batch tile for large batches


def _round_up(x, m):
    return ((x + m - 1) // m) * m


# ----------------------------------------------------------------------------
# Fused Pallas kernel: [Linear -> ReLU]*n_hidden -> Linear -> log_softmax
# ----------------------------------------------------------------------------
def _make_mlp_kernel(n_hidden):
    def kernel(x_ref, *refs):
        out_ref = refs[-1]
        wb = refs[:-1]                       # (w0, b0, w1, b1, ..., wout, bout)
        h = x_ref[...]                       # (TB, D0) f32
        for i in range(n_hidden):
            w = wb[2 * i][...]               # (Din, Dout) bf16, VMEM-resident
            b = wb[2 * i + 1][...]           # (1, Dout)  f32
            h = jnp.dot(h.astype(jnp.bfloat16), w,
                        preferred_element_type=jnp.float32)      # MXU, f32 acc
            h = jnp.maximum(h + b, 0.0)      # nlf = ReLU
        w = wb[2 * n_hidden][...]            # (Dh, OUT_SIZE) bf16
        b = wb[2 * n_hidden + 1][...]        # (1, OUT_SIZE)  f32
        logits = jnp.dot(h.astype(jnp.bfloat16), w,
                         preferred_element_type=jnp.float32) + b
        m = jnp.max(logits, axis=-1, keepdims=True)
        lse = m + jnp.log(jnp.sum(jnp.exp(logits - m), axis=-1, keepdims=True))
        out_ref[...] = (logits - lse).astype(out_ref.dtype)      # log_softmax
    return kernel


def mlp_forward(params_flat, x):
    """params_flat = (w0, b0, ..., wout, bout); x: (B, IN_SIZE) f32."""
    B, D = x.shape
    n_hidden = len(params_flat) // 2 - 1

    # Batch tiling: TB multiple of 8; pad B so the grid divides evenly.
    TB = BLOCK_B if B >= BLOCK_B else max(SUBLANE, _round_up(B, SUBLANE))
    Bp = _round_up(B, TB)
    if Bp != B:
        x = jnp.pad(x, ((0, Bp - B), (0, 0)))

    in_specs = [pl.BlockSpec((TB, D), lambda i: (i, 0))]
    for p in params_flat:                    # weights/biases: full block, resident
        in_specs.append(pl.BlockSpec(p.shape, lambda i: (0, 0)))

    out = pl.pallas_call(
        _make_mlp_kernel(n_hidden),
        out_shape=jax.ShapeDtypeStruct((Bp, OUT_SIZE), jnp.float32),
        grid=(Bp // TB,),
        in_specs=in_specs,
        out_specs=pl.BlockSpec((TB, OUT_SIZE), lambda i: (i, 0)),
        compiler_params=pltpu.CompilerParams(
            dimension_semantics=("parallel",)),     # megacore split on v7x
    )(x, *params_flat)
    return out[:B]


# ----------------------------------------------------------------------------
# Parameters: nn.Linear-style init, then lane-padding + bf16 cast for the TPU.
# ----------------------------------------------------------------------------
def init_params(key, layers):
    """Unpadded f32 params; weights stored as (in, out) = W.T of nn.Linear."""
    dims = [IN_SIZE] + list(layers) + [OUT_SIZE]
    ks = jax.random.split(key, 2 * (len(dims) - 1))
    params = []
    for i in range(len(dims) - 1):
        bound = 1.0 / (dims[i] ** 0.5)
        w = jax.random.uniform(ks[2 * i], (dims[i], dims[i + 1]),
                               jnp.float32, -bound, bound)
        b = jax.random.uniform(ks[2 * i + 1], (1, dims[i + 1]),
                               jnp.float32, -bound, bound)
        params.append((w, b))
    return params


def pad_params_for_tpu(params):
    """Zero-pad hidden widths to multiples of 128; weights -> bf16 (exact pad)."""
    n = len(params)
    flat = []
    prev_pad = 0
    for idx, (w, b) in enumerate(params):
        if prev_pad:                                   # padded rows contribute 0
            w = jnp.pad(w, ((0, prev_pad), (0, 0)))
        if idx < n - 1:                                # never pad OUT_SIZE=10
            cpad = _round_up(w.shape[1], LANE) - w.shape[1]
            if cpad:
                w = jnp.pad(w, ((0, 0), (0, cpad)))
                b = jnp.pad(b, ((0, 0), (0, cpad)))    # zero bias -> ReLU -> 0
            prev_pad = cpad
        else:
            prev_pad = 0
        flat.append(w.astype(jnp.bfloat16))
        flat.append(b.astype(jnp.float32))
    return tuple(flat)


def reference_forward(params_flat, x):
    """Pure-JAX reference using the same (bf16-operand, f32-acc) math."""
    n_hidden = len(params_flat) // 2 - 1
    h = x
    for i in range(n_hidden):
        w, b = params_flat[2 * i], params_flat[2 * i + 1]
        h = jnp.maximum(jnp.dot(h.astype(jnp.bfloat16), w,
                                preferred_element_type=jnp.float32) + b, 0.0)
    w, b = params_flat[-2], params_flat[-1]
    logits = jnp.dot(h.astype(jnp.bfloat16), w,
                     preferred_element_type=jnp.float32) + b
    return jax.nn.log_softmax(logits, axis=-1)


if __name__ == "__main__":
    key = jax.random.PRNGKey(0)
    kx, kp = jax.random.split(key)

    # MLP([300, 100], nlf=ReLU): hidden widths padded to 384/128 internally.
    layers = [300, 100]
    params_flat = pad_params_for_tpu(init_params(kp, layers))

    B = 2
    x = jax.random.normal(kx, (B, IN_SIZE), jnp.float32)

    fwd = jax.jit(mlp_forward)
    out = fwd(params_flat, x)
    jax.block_until_ready(out)

    assert out.shape == (B, OUT_SIZE)
    # log_softmax rows must sum to 1 in prob space
    assert bool(jnp.allclose(jnp.sum(jnp.exp(out), axis=-1), 1.0, atol=1e-4))
    # match the pure-JAX reference (identical bf16/f32 math)
    ref = reference_forward(params_flat, x)
    assert bool(jnp.allclose(out, ref, atol=1e-2, rtol=1e-2))
    print("KERNEL_OK")
</pallas_src>

<mosaic_0001>
module attributes {stable_mosaic.version = 11 : i64} {
  func.func @kernel(%arg0: i32, %arg1: memref<8x784xf32, #tpu.memory_space<vmem>>, %arg2: memref<784x384xbf16, #tpu.memory_space<vmem>>, %arg3: memref<1x384xf32, #tpu.memory_space<vmem>>, %arg4: memref<384x128xbf16, #tpu.memory_space<vmem>>, %arg5: memref<1x128xf32, #tpu.memory_space<vmem>>, %arg6: memref<128x10xbf16, #tpu.memory_space<vmem>>, %arg7: memref<1x10xf32, #tpu.memory_space<vmem>>, %arg8: memref<8x10xf32, #tpu.memory_space<vmem>>) attributes {dimension_semantics = [#tpu.dimension_semantics<parallel>], iteration_bounds = array<i64: 1>, scalar_prefetch = 0 : i64, scratch_operands = 0 : i64, tpu.core_type = #tpu.core_type<tc>, window_params = [{transform_indices = @transform_0, window_bounds = array<i64: 8, 784>}, {pipeline_mode = #tpu.pipeline_mode<synchronous>, transform_indices = @transform_1, window_bounds = array<i64: 784, 384>}, {pipeline_mode = #tpu.pipeline_mode<synchronous>, transform_indices = @transform_2, window_bounds = array<i64: 1, 384>}, {pipeline_mode = #tpu.pipeline_mode<synchronous>, transform_indices = @transform_3, window_bounds = array<i64: 384, 128>}, {pipeline_mode = #tpu.pipeline_mode<synchronous>, transform_indices = @transform_4, window_bounds = array<i64: 1, 128>}, {pipeline_mode = #tpu.pipeline_mode<synchronous>, transform_indices = @transform_5, window_bounds = array<i64: 128, 10>}, {pipeline_mode = #tpu.pipeline_mode<synchronous>, transform_indices = @transform_6, window_bounds = array<i64: 1, 10>}, {transform_indices = @transform_7, window_bounds = array<i64: 8, 10>}]} {
    %c0 = arith.constant 0 : index
    %c0_0 = arith.constant 0 : index
    %0 = vector.load %arg1[%c0, %c0_0] : memref<8x784xf32, #tpu.memory_space<vmem>>, vector<8x784xf32>
    %c0_1 = arith.constant 0 : index
    %c0_2 = arith.constant 0 : index
    %1 = vector.load %arg2[%c0_1, %c0_2] : memref<784x384xbf16, #tpu.memory_space<vmem>>, vector<784x384xbf16>
    %c0_3 = arith.constant 0 : index
    %c0_4 = arith.constant 0 : index
    %2 = vector.load %arg3[%c0_3, %c0_4] : memref<1x384xf32, #tpu.memory_space<vmem>>, vector<1x384xf32>
    %3 = arith.truncf %0 : vector<8x784xf32> to vector<8x784xbf16>
    %cst = arith.constant dense<0.000000e+00> : vector<8x384xf32>
    %4 = tpu.matmul %3, %1, %cst {dimension_numbers = #tpu.dot_dimension_numbers<[1], [0], [0], [1], [0, 0, 1, 1], [], []>} : vector<8x784xbf16>, vector<784x384xbf16>, vector<8x384xf32> -> vector<8x384xf32>
    %5 = vector.broadcast %2 : vector<1x384xf32> to vector<8x384xf32>
    %6 = arith.addf %4, %5 : vector<8x384xf32>
    %cst_5 = arith.constant 0.000000e+00 : f32
    %7 = vector.broadcast %cst_5 : f32 to vector<8x384xf32>
    %8 = arith.maximumf %6, %7 : vector<8x384xf32>
    %c0_6 = arith.constant 0 : index
    %c0_7 = arith.constant 0 : index
    %9 = vector.load %arg4[%c0_6, %c0_7] : memref<384x128xbf16, #tpu.memory_space<vmem>>, vector<384x128xbf16>
    %c0_8 = arith.constant 0 : index
    %c0_9 = arith.constant 0 : index
    %10 = vector.load %arg5[%c0_8, %c0_9] : memref<1x128xf32, #tpu.memory_space<vmem>>, vector<1x128xf32>
    %11 = arith.truncf %8 : vector<8x384xf32> to vector<8x384xbf16>
    %cst_10 = arith.constant dense<0.000000e+00> : vector<8x128xf32>
    %12 = tpu.matmul %11, %9, %cst_10 {dimension_numbers = #tpu.dot_dimension_numbers<[1], [0], [0], [1], [0, 0, 1, 1], [], []>} : vector<8x384xbf16>, vector<384x128xbf16>, vector<8x128xf32> -> vector<8x128xf32>
    %13 = vector.broadcast %10 : vector<1x128xf32> to vector<8x128xf32>
    %14 = arith.addf %12, %13 : vector<8x128xf32>
    %cst_11 = arith.constant 0.000000e+00 : f32
    %15 = vector.broadcast %cst_11 : f32 to vector<8x128xf32>
    %16 = arith.maximumf %14, %15 : vector<8x128xf32>
    %c0_12 = arith.constant 0 : index
    %c0_13 = arith.constant 0 : index
    %17 = vector.load %arg6[%c0_12, %c0_13] : memref<128x10xbf16, #tpu.memory_space<vmem>>, vector<128x10xbf16>
    %c0_14 = arith.constant 0 : index
    %c0_15 = arith.constant 0 : index
    %18 = vector.load %arg7[%c0_14, %c0_15] : memref<1x10xf32, #tpu.memory_space<vmem>>, vector<1x10xf32>
    %19 = arith.truncf %16 : vector<8x128xf32> to vector<8x128xbf16>
    %cst_16 = arith.constant dense<0.000000e+00> : vector<8x10xf32>
    %20 = tpu.matmul %19, %17, %cst_16 {dimension_numbers = #tpu.dot_dimension_numbers<[1], [0], [0], [1], [0, 0, 1, 1], [], []>} : vector<8x128xbf16>, vector<128x10xbf16>, vector<8x10xf32> -> vector<8x10xf32>
    %21 = vector.broadcast %18 : vector<1x10xf32> to vector<8x10xf32>
    %22 = arith.addf %20, %21 : vector<8x10xf32>
    %cst_17 = arith.constant dense<0xFF800000> : vector<8xf32>
    %23 = vector.multi_reduction <maximumf>, %22, %cst_17 [1] : vector<8x10xf32> to vector<8xf32>
    %24 = vector.shape_cast %23 : vector<8xf32> to vector<8x1xf32>
    %25 = vector.broadcast %24 : vector<8x1xf32> to vector<8x10xf32>
    %26 = arith.subf %22, %25 : vector<8x10xf32>
    %27 = math.exp %26 : vector<8x10xf32>
    %cst_18 = arith.constant dense<0.000000e+00> : vector<8xf32>
    %28 = vector.multi_reduction <add>, %27, %cst_18 [1] : vector<8x10xf32> to vector<8xf32>
    %29 = vector.shape_cast %28 : vector<8xf32> to vector<8x1xf32>
    %30 = math.log %29 : vector<8x1xf32>
    %31 = arith.addf %24, %30 : vector<8x1xf32>
    %32 = vector.broadcast %31 : vector<8x1xf32> to vector<8x10xf32>
    %33 = arith.subf %22, %32 : vector<8x10xf32>
    %c0_19 = arith.constant 0 : index
    %c0_20 = arith.constant 0 : index
    %34 = vector.load %arg8[%c0_19, %c0_20] : memref<8x10xf32, #tpu.memory_space<vmem>>, vector<8x10xf32>
    tpu.vector_store %arg8[%c0_19, %c0_20], %33 {strides = array<i32>} : memref<8x10xf32, #tpu.memory_space<vmem>>, vector<8x10xf32>,
    return
  }
  func.func @transform_0(%arg0: i32) -> (i32, i32) {
    %c0_i32 = arith.constant 0 : i32
    %c0_i32_0 = arith.constant 0 : i32
    return %arg0, %c0_i32 : i32, i32
  }
  func.func @transform_1(%arg0: i32) -> (i32, i32) {
    %c0_i32 = arith.constant 0 : i32
    %c0_i32_0 = arith.constant 0 : i32
    %c0_i32_1 = arith.constant 0 : i32
    return %c0_i32, %c0_i32_0 : i32, i32
  }
  func.func @transform_2(%arg0: i32) -> (i32, i32) {
    %c0_i32 = arith.constant 0 : i32
    %c0_i32_0 = arith.constant 0 : i32
    %c0_i32_1 = arith.constant 0 : i32
    return %c0_i32, %c0_i32_0 : i32, i32
  }
  func.func @transform_3(%arg0: i32) -> (i32, i32) {
    %c0_i32 = arith.constant 0 : i32
    %c0_i32_0 = arith.constant 0 : i32
    %c0_i32_1 = arith.constant 0 : i32
    return %c0_i32, %c0_i32_0 : i32, i32
  }
  func.func @transform_4(%arg0: i32) -> (i32, i32) {
    %c0_i32 = arith.constant 0 : i32
    %c0_i32_0 = arith.constant 0 : i32
    %c0_i32_1 = arith.constant 0 : i32
    return %c0_i32, %c0_i32_0 : i32, i32
  }
  func.func @transform_5(%arg0: i32) -> (i32, i32) {
    %c0_i32 = arith.constant 0 : i32
    %c0_i32_0 = arith.constant 0 : i32
    %c0_i32_1 = arith.constant 0 : i32
    return %c0_i32, %c0_i32_0 : i32, i32
  }
  func.func @transform_6(%arg0: i32) -> (i32, i32) {
    %c0_i32 = arith.constant 0 : i32
    %c0_i32_0 = arith.constant 0 : i32
    %c0_i32_1 = arith.constant 0 : i32
    return %c0_i32, %c0_i32_0 : i32, i32
  }
  func.func @transform_7(%arg0: i32) -> (i32, i32) {
    %c0_i32 = arith.constant 0 : i32
    %c0_i32_0 = arith.constant 0 : i32
    return %arg0, %c0_i32 : i32, i32
  }
}

</mosaic_0001>

<llo_original>
// kernel: mlp_forward.1
$region0: #{mlp_forward.1}
  #allocation0 [shape = 'u32[]', space=smem, size = 0x4, offset = 0x4, fixed_abs, tag = 'smem constant byte address 0x4 - core index']
  #allocation1 [shape = 'u32[72,128]{1,0:T(1,128)}', space=vmem, size = 0x9000, scoped, tag = 'internal scratch']
  %s0 = inlined_call_operand.vmem [shape: f32[8,784], index: 0, kind: input, shape index: {}]
  %s1 = inlined_call_operand.hbm [shape: bf16[784,384], index: 1, kind: input, shape index: {}]
  %s2 = inlined_call_operand.vmem [shape: f32[1,384], index: 2, kind: input, shape index: {}]
  %s3 = inlined_call_operand.hbm [shape: bf16[384,128], index: 3, kind: input, shape index: {}]
  %s4 = inlined_call_operand.vmem [shape: f32[1,128], index: 4, kind: input, shape index: {}]
  %s5 = inlined_call_operand.vmem [shape: bf16[128,10], index: 5, kind: input, shape index: {}]
  %s6 = inlined_call_operand.vmem [shape: f32[1,10], index: 6, kind: input, shape index: {}]
  %s7 = inlined_call_operand.vmem [shape: f32[8,10], index: 7, kind: output, shape index: {}]
  %s8 = sld [smem:[#allocation0]]
  $region46: #{mlp_forward.1} parent=0
    _
  %s10 = ssub.s32 1, %s8
  %s11 = scalar_select 0, %s10, %s8
  $region1: #{mlp_forward.1} parent=0
    #allocation2 [shape = 'u8[602112]{0}', space=vmem, size = 0x93000, scoped, tag = 'input window, operand 1, single buffered']
    #allocation3 [shape = 's32[1]{0}', space=sflag, size = 0x4, scoped, tag = 'scoped memory for mlp_forward.1']
    #allocation4 [shape = 'u8[98304]{0}', space=vmem, size = 0x18000, scoped, tag = 'input window, operand 3, single buffered']
    #allocation5 [shape = 's32[1]{0}', space=sflag, size = 0x4, scoped, tag = 'scoped memory for mlp_forward.1']
    %12 = vsyncpa [#allocation3], 0
    %13 = vsyncpa [#allocation5], 0
    // Predicated region
    $region2: #{mlp_forward.1} parent=1 // pred_check
      _
    $region3: #{mlp_forward.1} parent=1 // pred_check_branch
      %15 = sbr.rel (0) target = $region5
    $region4: #{mlp_forward.1} parent=1 // pred_region
      _
    $region5: #{mlp_forward.1} parent=1 // pred_fallthru
      _
    // Predicated region
    $region6: #{mlp_forward.1} parent=1 // pred_check
      _
    $region7: #{mlp_forward.1} parent=1 // pred_check_branch
      %17 = sbr.rel (0) target = $region9
    $region8: #{mlp_forward.1} parent=1 // pred_region
      %19 = vsyncadd [#allocation3], 0
      %s20 = sshll.u32 %s1, 4
      %s21 = int_to_ptr.hbm [resolvable:$true] %s20
      %s22 = sshll.u32 [#allocation2], 4
      %s23 = int_to_ptr.vmem [resolvable:$true] %s22
      %28 = dma.hbm_to_vmem [thread:$0]  %s21, 18816, %s23, [#allocation3], 192, 192, 12
    $region9: #{mlp_forward.1} parent=1 // pred_fallthru
      _
    // Predicated region
    $region10: #{mlp_forward.1} parent=1 // pred_check
      _
    $region11: #{mlp_forward.1} parent=1 // pred_check_branch
      %30 = sbr.rel (0) target = $region13
    $region12: #{mlp_forward.1} parent=1 // pred_region
      _
    $region13: #{mlp_forward.1} parent=1 // pred_fallthru
      _
    // Predicated region
    $region14: #{mlp_forward.1} parent=1 // pred_check
      _
    $region15: #{mlp_forward.1} parent=1 // pred_check_branch
      %32 = sbr.rel (0) target = $region17
    $region16: #{mlp_forward.1} parent=1 // pred_region
      %34 = vsyncadd [#allocation5], 0
      %s35 = sshll.u32 %s3, 4
      %s36 = int_to_ptr.hbm [resolvable:$true] %s35
      %s37 = sshll.u32 [#allocation4], 4
      %s38 = int_to_ptr.vmem [resolvable:$true] %s37
      %43 = dma.hbm_to_vmem [thread:$0]  %s36, 3072, %s38, [#allocation5], 64, 64, 4
    $region17: #{mlp_forward.1} parent=1 // pred_fallthru
      _
    // Predicated region
    $region18: #{mlp_forward.1} parent=1 // pred_check
      _
    $region19: #{mlp_forward.1} parent=1 // pred_check_branch
      %45 = sbr.rel (0) target = $region21
    $region20: #{mlp_forward.1} parent=1 // pred_region
      _
    $region21: #{mlp_forward.1} parent=1 // pred_fallthru
      _
    // Predicated region
    $region22: #{mlp_forward.1} parent=1 // pred_check
      _
    $region23: #{mlp_forward.1} parent=1 // pred_check_branch
      %47 = sbr.rel (0) target = $region25
    $region24: #{mlp_forward.1} parent=1 // pred_region
      _
    $region25: #{mlp_forward.1} parent=1 // pred_fallthru
      _
    // Predicated region
    $region26: #{mlp_forward.1} parent=1 // pred_check
      _
    $region27: #{mlp_forward.1} parent=1 // pred_check_branch
      %49 = sbr.rel (0) target = $region29
    $region28: #{mlp_forward.1} parent=1 // pred_region
      _
    $region29: #{mlp_forward.1} parent=1 // pred_fallthru
      _
    // Predicated region
    $region30: #{mlp_forward.1} parent=1 // pred_check
      _
    $region31: #{mlp_forward.1} parent=1 // pred_check_branch
      %51 = sbr.rel (0) target = $region33
    $region32: #{mlp_forward.1} parent=1 // pred_region
      %53 = dma.done [#allocation3], 18816
    $region33: #{mlp_forward.1} parent=1 // pred_fallthru
      _
    // Predicated region
    $region34: #{mlp_forward.1} parent=1 // pred_check
      _
    $region35: #{mlp_forward.1} parent=1 // pred_check_branch
      %55 = sbr.rel (0) target = $region37
    $region36: #{mlp_forward.1} parent=1 // pred_region
      %57 = dma.done [#allocation5], 3072
    $region37: #{mlp_forward.1} parent=1 // pred_fallthru
      _
    %v59 = vld [vmem:[%s0] sm:$0xff]
    %v60 = vld [vmem:[%s0 + $0x8] sm:$0xff]
    %v61 = vld [vmem:[%s0 + $0x10] sm:$0xff]
    %v62 = vld [vmem:[%s0 + $0x18] sm:$0xff]
    %v63 = vld [vmem:[%s0 + $0x20] sm:$0xff]
    %v64 = vld [vmem:[%s0 + $0x28] sm:$0xff]
    %v65 = vld [vmem:[%s0 + $0x30] sm:$0xff]
    %v66 = vld [vmem:[#allocation2] sm:$0xff]
    %v67 = vld [vmem:[#allocation2 + $0x8] sm:$0xf]
    %v68 = vld [vmem:[#allocation2 + $0xc] sm:$0xff]
    %v69 = vld [vmem:[#allocation2 + $0x14] sm:$0xf]
    %v70 = vld [vmem:[#allocation2 + $0x18] sm:$0xff]
    %v71 = vld [vmem:[#allocation2 + $0x20] sm:$0xf]
    %v72 = vld [vmem:[#allocation2 + $0x24] sm:$0xff]
    %v73 = vld [vmem:[#allocation2 + $0x2c] sm:$0xf]
    %v74 = vld [vmem:[#allocation2 + $0x30] sm:$0xff]
    %v75 = vld [vmem:[#allocation2 + $0x38] sm:$0xf]
    %v76 = vld [vmem:[#allocation2 + $0x3c] sm:$0xff]
    %v77 = vld [vmem:[#allocation2 + $0x44] sm:$0xf]
    %v78 = vld [vmem:[#allocation2 + $0x48] sm:$0xff]
    %v79 = vld [vmem:[#allocation2 + $0x50] sm:$0xf]
    %v80 = vld [vmem:[#allocation2 + $0x54] sm:$0xff]
    %v81 = vld [vmem:[#allocation2 + $0x5c] sm:$0xf]
    %v82 = vld [vmem:[#allocation2 + $0x60] sm:$0xff]
    %v83 = vld [vmem:[#allocation2 + $0x68] sm:$0xf]
    %v84 = vld [vmem:[#allocation2 + $0x6c] sm:$0xff]
    %v85 = vld [vmem:[#allocation2 + $0x74] sm:$0xf]
    %v86 = vld [vmem:[#allocation2 + $0x78] sm:$0xff]
    %v87 = vld [vmem:[#allocation2 + $0x80] sm:$0xf]
    %v88 = vld [vmem:[#allocation2 + $0x84] sm:$0xff]
    %v89 = vld [vmem:[#allocation2 + $0x8c] sm:$0xf]
    %v90 = vld [vmem:[#allocation2 + $0x90] sm:$0xff]
    %v91 = vld [vmem:[#allocation2 + $0x98] sm:$0xf]
    %v92 = vld [vmem:[#allocation2 + $0x9c] sm:$0xff]
    %v93 = vld [vmem:[#allocation2 + $0xa4] sm:$0xf]
    %v94 = vld [vmem:[#allocation2 + $0xa8] sm:$0xff]
    %v95 = vld [vmem:[#allocation2 + $0xb0] sm:$0xf]
    %v96 = vld [vmem:[#allocation2 + $0xb4] sm:$0xff]
    %v97 = vld [vmem:[#allocation2 + $0xbc] sm:$0xf]
    %v98 = vld [vmem:[#allocation2 + $0xc0] sm:$0xff]
    %v99 = vld [vmem:[#allocation2 + $0xc8] sm:$0xf]
    %v100 = vld [vmem:[#allocation2 + $0xcc] sm:$0xff]
    %v101 = vld [vmem:[#allocation2 + $0xd4] sm:$0xf]
    %v102 = vld [vmem:[#allocation2 + $0xd8] sm:$0xff]
    %v103 = vld [vmem:[#allocation2 + $0xe0] sm:$0xf]
    %v104 = vld [vmem:[#allocation2 + $0xe4] sm:$0xff]
    %v105 = vld [vmem:[#allocation2 + $0xec] sm:$0xf]
    %v106 = vld [vmem:[#allocation2 + $0xf0] sm:$0xff]
    %v107 = vld [vmem:[#allocation2 + $0xf8] sm:$0xf]
    %v108 = vld [vmem:[#allocation2 + $0xfc] sm:$0xff]
    %v109 = vld [vmem:[#allocation2 + $0x104] sm:$0xf]
    %v110 = vld [vmem:[#allocation2 + $0x108] sm:$0xff]
    %v111 = vld [vmem:[#allocation2 + $0x110] sm:$0xf]
    %v112 = vld [vmem:[#allocation2 + $0x114] sm:$0xff]
    %v113 = vld [vmem:[#allocation2 + $0x11c] sm:$0xf]
    %v114 = vld [vmem:[#allocation2 + $0x120] sm:$0xff]
    %v115 = vld [vmem:[#allocation2 + $0x128] sm:$0xf]
    %v116 = vld [vmem:[#allocation2 + $0x12c] sm:$0xff]
    %v117 = vld [vmem:[#allocation2 + $0x134] sm:$0xf]
    %v118 = vld [vmem:[#allocation2 + $0x138] sm:$0xff]
    %v119 = vld [vmem:[#allocation2 + $0x140] sm:$0xf]
    %v120 = vld [vmem:[#allocation2 + $0x144] sm:$0xff]
    %v121 = vld [vmem:[#allocation2 + $0x14c] sm:$0xf]
    %v122 = vld [vmem:[#allocation2 + $0x150] sm:$0xff]
    %v123 = vld [vmem:[#allocation2 + $0x158] sm:$0xf]
    %v124 = vld [vmem:[#allocation2 + $0x15c] sm:$0xff]
    %v125 = vld [vmem:[#allocation2 + $0x164] sm:$0xf]
    %v126 = vld [vmem:[#allocation2 + $0x168] sm:$0xff]
    %v127 = vld [vmem:[#allocation2 + $0x170] sm:$0xf]
    %v128 = vld [vmem:[#allocation2 + $0x174] sm:$0xff]
    %v129 = vld [vmem:[#allocation2 + $0x17c] sm:$0xf]
    %v130 = vld [vmem:[#allocation2 + $0x180] sm:$0xff]
    %v131 = vld [vmem:[#allocation2 + $0x188] sm:$0xf]
    %v132 = vld [vmem:[#allocation2 + $0x18c] sm:$0xff]
    %v133 = vld [vmem:[#allocation2 + $0x194] sm:$0xf]
    %v134 = vld [vmem:[#allocation2 + $0x198] sm:$0xff]
    %v135 = vld [vmem:[#allocation2 + $0x1a0] sm:$0xf]
    %v136 = vld [vmem:[#allocation2 + $0x1a4] sm:$0xff]
    %v137 = vld [vmem:[#allocation2 + $0x1ac] sm:$0xf]
    %v138 = vld [vmem:[#allocation2 + $0x1b0] sm:$0xff]
    %v139 = vld [vmem:[#allocation2 + $0x1b8] sm:$0xf]
    %v140 = vld [vmem:[#allocation2 + $0x1bc] sm:$0xff]
    %v141 = vld [vmem:[#allocation2 + $0x1c4] sm:$0xf]
    %v142 = vld [vmem:[#allocation2 + $0x1c8] sm:$0xff]
    %v143 = vld [vmem:[#allocation2 + $0x1d0] sm:$0xf]
    %v144 = vld [vmem:[#allocation2 + $0x1d4] sm:$0xff]
    %v145 = vld [vmem:[#allocation2 + $0x1dc] sm:$0xf]
    %v146 = vld [vmem:[#allocation2 + $0x1e0] sm:$0xff]
    %v147 = vld [vmem:[#allocation2 + $0x1e8] sm:$0xf]
    %v148 = vld [vmem:[#allocation2 + $0x1ec] sm:$0xff]
    %v149 = vld [vmem:[#allocation2 + $0x1f4] sm:$0xf]
    %v150 = vld [vmem:[#allocation2 + $0x1f8] sm:$0xff]
    %v151 = vld [vmem:[#allocation2 + $0x200] sm:$0xf]
    %v152 = vld [vmem:[#allocation2 + $0x204] sm:$0xff]
    %v153 = vld [vmem:[#allocation2 + $0x20c] sm:$0xf]
    %v154 = vld [vmem:[#allocation2 + $0x210] sm:$0xff]
    %v155 = vld [vmem:[#allocation2 + $0x218] sm:$0xf]
    %v156 = vld [vmem:[#allocation2 + $0x21c] sm:$0xff]
    %v157 = vld [vmem:[#allocation2 + $0x224] sm:$0xf]
    %v158 = vld [vmem:[#allocation2 + $0x228] sm:$0xff]
    %v159 = vld [vmem:[#allocation2 + $0x230] sm:$0xf]
    %v160 = vld [vmem:[#allocation2 + $0x234] sm:$0xff]
    %v161 = vld [vmem:[#allocation2 + $0x23c] sm:$0xf]
    %v162 = vld [vmem:[#allocation2 + $0x240] sm:$0xff]
    %v163 = vld [vmem:[#allocation2 + $0x248] sm:$0xf]
    %v164 = vld [vmem:[#allocation2 + $0x24c] sm:$0xff]
    %v165 = vld [vmem:[#allocation2 + $0x254] sm:$0xf]
    %v166 = vld [vmem:[#allocation2 + $0x258] sm:$0xff]
    %v167 = vld [vmem:[#allocation2 + $0x260] sm:$0xf]
    %v168 = vld [vmem:[#allocation2 + $0x264] sm:$0xff]
    %v169 = vld [vmem:[#allocation2 + $0x26c] sm:$0xf]
    %v170 = vld [vmem:[#allocation2 + $0x270] sm:$0xff]
    %v171 = vld [vmem:[#allocation2 + $0x278] sm:$0xf]
    %v172 = vld [vmem:[#allocation2 + $0x27c] sm:$0xff]
    %v173 = vld [vmem:[#allocation2 + $0x284] sm:$0xf]
    %v174 = vld [vmem:[#allocation2 + $0x288] sm:$0xff]
    %v175 = vld [vmem:[#allocation2 + $0x290] sm:$0xf]
    %v176 = vld [vmem:[#allocation2 + $0x294] sm:$0xff]
    %v177 = vld [vmem:[#allocation2 + $0x29c] sm:$0xf]
    %v178 = vld [vmem:[#allocation2 + $0x2a0] sm:$0xff]
    %v179 = vld [vmem:[#allocation2 + $0x2a8] sm:$0xf]
    %v180 = vld [vmem:[#allocation2 + $0x2ac] sm:$0xff]
    %v181 = vld [vmem:[#allocation2 + $0x2b4] sm:$0xf]
    %v182 = vld [vmem:[#allocation2 + $0x2b8] sm:$0xff]
    %v183 = vld [vmem:[#allocation2 + $0x2c0] sm:$0xf]
    %v184 = vld [vmem:[#allocation2 + $0x2c4] sm:$0xff]
    %v185 = vld [vmem:[#allocation2 + $0x2cc] sm:$0xf]
    %v186 = vld [vmem:[#allocation2 + $0x2d0] sm:$0xff]
    %v187 = vld [vmem:[#allocation2 + $0x2d8] sm:$0xf]
    %v188 = vld [vmem:[#allocation2 + $0x2dc] sm:$0xff]
    %v189 = vld [vmem:[#allocation2 + $0x2e4] sm:$0xf]
    %v190 = vld [vmem:[#allocation2 + $0x2e8] sm:$0xff]
    %v191 = vld [vmem:[#allocation2 + $0x2f0] sm:$0xf]
    %v192 = vld [vmem:[#allocation2 + $0x2f4] sm:$0xff]
    %v193 = vld [vmem:[#allocation2 + $0x2fc] sm:$0xf]
    %v194 = vld [vmem:[#allocation2 + $0x300] sm:$0xff]
    %v195 = vld [vmem:[#allocation2 + $0x308] sm:$0xf]
    %v196 = vld [vmem:[#allocation2 + $0x30c] sm:$0xff]
    %v197 = vld [vmem:[#allocation2 + $0x314] sm:$0xf]
    %v198 = vld [vmem:[#allocation2 + $0x318] sm:$0xff]
    %v199 = vld [vmem:[#allocation2 + $0x320] sm:$0xf]
    %v200 = vld [vmem:[#allocation2 + $0x324] sm:$0xff]
    %v201 = vld [vmem:[#allocation2 + $0x32c] sm:$0xf]
    %v202 = vld [vmem:[#allocation2 + $0x330] sm:$0xff]
    %v203 = vld [vmem:[#allocation2 + $0x338] sm:$0xf]
    %v204 = vld [vmem:[#allocation2 + $0x33c] sm:$0xff]
    %v205 = vld [vmem:[#allocation2 + $0x344] sm:$0xf]
    %v206 = vld [vmem:[#allocation2 + $0x348] sm:$0xff]
    %v207 = vld [vmem:[#allocation2 + $0x350] sm:$0xf]
    %v208 = vld [vmem:[#allocation2 + $0x354] sm:$0xff]
    %v209 = vld [vmem:[#allocation2 + $0x35c] sm:$0xf]
    %v210 = vld [vmem:[#allocation2 + $0x360] sm:$0xff]
    %v211 = vld [vmem:[#allocation2 + $0x368] sm:$0xf]
    %v212 = vld [vmem:[#allocation2 + $0x36c] sm:$0xff]
    %v213 = vld [vmem:[#allocation2 + $0x374] sm:$0xf]
    %v214 = vld [vmem:[#allocation2 + $0x378] sm:$0xff]
    %v215 = vld [vmem:[#allocation2 + $0x380] sm:$0xf]
    %v216 = vld [vmem:[#allocation2 + $0x384] sm:$0xff]
    %v217 = vld [vmem:[#allocation2 + $0x38c] sm:$0xf]
    %v218 = vld [vmem:[#allocation2 + $0x390] sm:$0xff]
    %v219 = vld [vmem:[#allocation2 + $0x398] sm:$0xf]
    %v220 = vld [vmem:[#allocation2 + $0x39c] sm:$0xff]
    %v221 = vld [vmem:[#allocation2 + $0x3a4] sm:$0xf]
    %v222 = vld [vmem:[#allocation2 + $0x3a8] sm:$0xff]
    %v223 = vld [vmem:[#allocation2 + $0x3b0] sm:$0xf]
    %v224 = vld [vmem:[#allocation2 + $0x3b4] sm:$0xff]
    %v225 = vld [vmem:[#allocation2 + $0x3bc] sm:$0xf]
    %v226 = vld [vmem:[#allocation2 + $0x3c0] sm:$0xff]
    %v227 = vld [vmem:[#allocation2 + $0x3c8] sm:$0xf]
    %v228 = vld [vmem:[#allocation2 + $0x3cc] sm:$0xff]
    %v229 = vld [vmem:[#allocation2 + $0x3d4] sm:$0xf]
    %v230 = vld [vmem:[#allocation2 + $0x3d8] sm:$0xff]
    %v231 = vld [vmem:[#allocation2 + $0x3e0] sm:$0xf]
    %v232 = vld [vmem:[#allocation2 + $0x3e4] sm:$0xff]
    %v233 = vld [vmem:[#allocation2 + $0x3ec] sm:$0xf]
    %v234 = vld [vmem:[#allocation2 + $0x3f0] sm:$0xff]
    %v235 = vld [vmem:[#allocation2 + $0x3f8] sm:$0xf]
    %v236 = vld [vmem:[#allocation2 + $0x3fc] sm:$0xff]
    %v237 = vld [vmem:[#allocation2 + $0x404] sm:$0xf]
    %v238 = vld [vmem:[#allocation2 + $0x408] sm:$0xff]
    %v239 = vld [vmem:[#allocation2 + $0x410] sm:$0xf]
    %v240 = vld [vmem:[#allocation2 + $0x414] sm:$0xff]
    %v241 = vld [vmem:[#allocation2 + $0x41c] sm:$0xf]
    %v242 = vld [vmem:[#allocation2 + $0x420] sm:$0xff]
    %v243 = vld [vmem:[#allocation2 + $0x428] sm:$0xf]
    %v244 = vld [vmem:[#allocation2 + $0x42c] sm:$0xff]
    %v245 = vld [vmem:[#allocation2 + $0x434] sm:$0xf]
    %v246 = vld [vmem:[#allocation2 + $0x438] sm:$0xff]
    %v247 = vld [vmem:[#allocation2 + $0x440] sm:$0xf]
    %v248 = vld [vmem:[#allocation2 + $0x444] sm:$0xff]
    %v249 = vld [vmem:[#allocation2 + $0x44c] sm:$0xf]
    %v250 = vld [vmem:[#allocation2 + $0x450] sm:$0xff]
    %v251 = vld [vmem:[#allocation2 + $0x458] sm:$0xf]
    %v252 = vld [vmem:[#allocation2 + $0x45c] sm:$0xff]
    %v253 = vld [vmem:[#allocation2 + $0x464] sm:$0xf]
    %v254 = vld [vmem:[#allocation2 + $0x468] sm:$0xff]
    %v255 = vld [vmem:[#allocation2 + $0x470] sm:$0xf]
    %v256 = vld [vmem:[#allocation2 + $0x474] sm:$0xff]
    %v257 = vld [vmem:[#allocation2 + $0x47c] sm:$0xf]
    %v258 = vld [vmem:[#allocation2 + $0x480] sm:$0xff]
    %v259 = vld [vmem:[#allocation2 + $0x488] sm:$0xf]
    %v260 = vld [vmem:[#allocation2 + $0x48c] sm:$0xff]
    %v261 = vld [vmem:[#allocation2 + $0x494] sm:$0xf]
    %v262 = vld [vmem:[%s2] sm:$0x7]
    %v263 = vpack.c.bf16 %v59, %v59
    %v264 = vpack.c.bf16 %v60, %v60
    %v265 = vpack.c.bf16 %v61, %v61
    %v266 = vpack.c.bf16 %v62, %v62
    %v267 = vpack.c.bf16 %v63, %v63
    %v268 = vpack.c.bf16 %v64, %v64
    %v269 = vpack.c.bf16 %v65, %v65
    %v271 = vperm.slane %v262, 0
    %v272 = vperm.slane %v262, 1
    %v273 = vperm.slane %v262, 2
    %v473 = vunpack.c.l.b16 %v66
    %v474 = vunpack.c.h.b16 %v66
    %v475 = vunpack.c.l.b16 %v67
    %v476 = vunpack.c.l.b16 %v68
    %v477 = vunpack.c.h.b16 %v68
    %v478 = vunpack.c.l.b16 %v69
    %v479 = vunpack.c.l.b16 %v70
    %v480 = vunpack.c.h.b16 %v70
    %v481 = vunpack.c.l.b16 %v71
    %v482 = vunpack.c.l.b16 %v72
    %v483 = vunpack.c.h.b16 %v72
    %v484 = vunpack.c.l.b16 %v73
    %v485 = vunpack.c.l.b16 %v74
    %v486 = vunpack.c.h.b16 %v74
    %v487 = vunpack.c.l.b16 %v75
    %v488 = vunpack.c.l.b16 %v76
    %v489 = vunpack.c.h.b16 %v76
    %v490 = vunpack.c.l.b16 %v77
    %v491 = vunpack.c.l.b16 %v78
    %v492 = vunpack.c.h.b16 %v78
    %v493 = vunpack.c.l.b16 %v79
    %v494 = vunpack.c.l.b16 %v80
    %v495 = vunpack.c.h.b16 %v80
    %v496 = vunpack.c.l.b16 %v81
    %v497 = vunpack.c.l.b16 %v82
    %v498 = vunpack.c.h.b16 %v82
    %v499 = vunpack.c.l.b16 %v83
    %v500 = vunpack.c.l.b16 %v84
    %v501 = vunpack.c.h.b16 %v84
    %v502 = vunpack.c.l.b16 %v85
    %v503 = vunpack.c.l.b16 %v86
    %v504 = vunpack.c.h.b16 %v86
    %v505 = vunpack.c.l.b16 %v87
    %v506 = vunpack.c.l.b16 %v88
    %v507 = vunpack.c.h.b16 %v88
    %v508 = vunpack.c.l.b16 %v89
    %v509 = vunpack.c.l.b16 %v90
    %v510 = vunpack.c.h.b16 %v90
    %v511 = vunpack.c.l.b16 %v91
    %v512 = vunpack.c.l.b16 %v92
    %v513 = vunpack.c.h.b16 %v92
    %v514 = vunpack.c.l.b16 %v93
    %v515 = vunpack.c.l.b16 %v94
    %v516 = vunpack.c.h.b16 %v94
    %v517 = vunpack.c.l.b16 %v95
    %v518 = vunpack.c.l.b16 %v96
    %v519 = vunpack.c.h.b16 %v96
    %v520 = vunpack.c.l.b16 %v97
    %v521 = vunpack.c.l.b16 %v98
    %v522 = vunpack.c.h.b16 %v98
    %v523 = vunpack.c.l.b16 %v99
    %v524 = vunpack.c.l.b16 %v100
    %v525 = vunpack.c.h.b16 %v100
    %v526 = vunpack.c.l.b16 %v101
    %v527 = vunpack.c.l.b16 %v102
    %v528 = vunpack.c.h.b16 %v102
    %v529 = vunpack.c.l.b16 %v103
    %v530 = vunpack.c.l.b16 %v104
    %v531 = vunpack.c.h.b16 %v104
    %v532 = vunpack.c.l.b16 %v105
    %v533 = vunpack.c.l.b16 %v106
    %v534 = vunpack.c.h.b16 %v106
    %v535 = vunpack.c.l.b16 %v107
    %v536 = vunpack.c.l.b16 %v108
    %v537 = vunpack.c.h.b16 %v108
    %v538 = vunpack.c.l.b16 %v109
    %v539 = vunpack.c.l.b16 %v110
    %v540 = vunpack.c.h.b16 %v110
    %v541 = vunpack.c.l.b16 %v111
    %v542 = vunpack.c.l.b16 %v112
    %v543 = vunpack.c.h.b16 %v112
    %v544 = vunpack.c.l.b16 %v113
    %v545 = vunpack.c.l.b16 %v114
    %v546 = vunpack.c.h.b16 %v114
    %v547 = vunpack.c.l.b16 %v115
    %v548 = vunpack.c.l.b16 %v116
    %v549 = vunpack.c.h.b16 %v116
    %v550 = vunpack.c.l.b16 %v117
    %v551 = vunpack.c.l.b16 %v118
    %v552 = vunpack.c.h.b16 %v118
    %v553 = vunpack.c.l.b16 %v119
    %v554 = vunpack.c.l.b16 %v120
    %v555 = vunpack.c.h.b16 %v120
    %v556 = vunpack.c.l.b16 %v121
    %v557 = vunpack.c.l.b16 %v122
    %v558 = vunpack.c.h.b16 %v122
    %v559 = vunpack.c.l.b16 %v123
    %v560 = vunpack.c.l.b16 %v124
    %v561 = vunpack.c.h.b16 %v124
    %v562 = vunpack.c.l.b16 %v125
    %v563 = vunpack.c.l.b16 %v126
    %v564 = vunpack.c.h.b16 %v126
    %v565 = vunpack.c.l.b16 %v127
    %v566 = vunpack.c.l.b16 %v128
    %v567 = vunpack.c.h.b16 %v128
    %v568 = vunpack.c.l.b16 %v129
    %v569 = vunpack.c.l.b16 %v130
    %v570 = vunpack.c.h.b16 %v130
    %v571 = vunpack.c.l.b16 %v131
    %v572 = vunpack.c.l.b16 %v132
    %v573 = vunpack.c.h.b16 %v132
    %v574 = vunpack.c.l.b16 %v133
    %v575 = vunpack.c.l.b16 %v134
    %v576 = vunpack.c.h.b16 %v134
    %v577 = vunpack.c.l.b16 %v135
    %v578 = vunpack.c.l.b16 %v136
    %v579 = vunpack.c.h.b16 %v136
    %v580 = vunpack.c.l.b16 %v137
    %v581 = vunpack.c.l.b16 %v138
    %v582 = vunpack.c.h.b16 %v138
    %v583 = vunpack.c.l.b16 %v139
    %v584 = vunpack.c.l.b16 %v140
    %v585 = vunpack.c.h.b16 %v140
    %v586 = vunpack.c.l.b16 %v141
    %v587 = vunpack.c.l.b16 %v142
    %v588 = vunpack.c.h.b16 %v142
    %v589 = vunpack.c.l.b16 %v143
    %v590 = vunpack.c.l.b16 %v144
    %v591 = vunpack.c.h.b16 %v144
    %v592 = vunpack.c.l.b16 %v145
    %v593 = vunpack.c.l.b16 %v146
    %v594 = vunpack.c.h.b16 %v146
    %v595 = vunpack.c.l.b16 %v147
    %v596 = vunpack.c.l.b16 %v148
    %v597 = vunpack.c.h.b16 %v148
    %v598 = vunpack.c.l.b16 %v149
    %v599 = vunpack.c.l.b16 %v150
    %v600 = vunpack.c.h.b16 %v150
    %v601 = vunpack.c.l.b16 %v151
    %v602 = vunpack.c.l.b16 %v152
    %v603 = vunpack.c.h.b16 %v152
    %v604 = vunpack.c.l.b16 %v153
    %v605 = vunpack.c.l.b16 %v154
    %v606 = vunpack.c.h.b16 %v154
    %v607 = vunpack.c.l.b16 %v155
    %v608 = vunpack.c.l.b16 %v156
    %v609 = vunpack.c.h.b16 %v156
    %v610 = vunpack.c.l.b16 %v157
    %v611 = vunpack.c.l.b16 %v158
    %v612 = vunpack.c.h.b16 %v158
    %v613 = vunpack.c.l.b16 %v159
    %v614 = vunpack.c.l.b16 %v160
    %v615 = vunpack.c.h.b16 %v160
    %v616 = vunpack.c.l.b16 %v161
    %v617 = vunpack.c.l.b16 %v162
    %v618 = vunpack.c.h.b16 %v162
    %v619 = vunpack.c.l.b16 %v163
    %v620 = vunpack.c.l.b16 %v164
    %v621 = vunpack.c.h.b16 %v164
    %v622 = vunpack.c.l.b16 %v165
    %v623 = vunpack.c.l.b16 %v166
    %v624 = vunpack.c.h.b16 %v166
    %v625 = vunpack.c.l.b16 %v167
    %v626 = vunpack.c.l.b16 %v168
    %v627 = vunpack.c.h.b16 %v168
    %v628 = vunpack.c.l.b16 %v169
    %v629 = vunpack.c.l.b16 %v170
    %v630 = vunpack.c.h.b16 %v170
    %v631 = vunpack.c.l.b16 %v171
    %v632 = vunpack.c.l.b16 %v172
    %v633 = vunpack.c.h.b16 %v172
    %v634 = vunpack.c.l.b16 %v173
    %v635 = vunpack.c.l.b16 %v174
    %v636 = vunpack.c.h.b16 %v174
    %v637 = vunpack.c.l.b16 %v175
    %v638 = vunpack.c.l.b16 %v176
    %v639 = vunpack.c.h.b16 %v176
    %v640 = vunpack.c.l.b16 %v177
    %v641 = vunpack.c.l.b16 %v178
    %v642 = vunpack.c.h.b16 %v178
    %v643 = vunpack.c.l.b16 %v179
    %v644 = vunpack.c.l.b16 %v180
    %v645 = vunpack.c.h.b16 %v180
    %v646 = vunpack.c.l.b16 %v181
    %v647 = vunpack.c.l.b16 %v182
    %v648 = vunpack.c.h.b16 %v182
    %v649 = vunpack.c.l.b16 %v183
    %v650 = vunpack.c.l.b16 %v184
    %v651 = vunpack.c.h.b16 %v184
    %v652 = vunpack.c.l.b16 %v185
    %v653 = vunpack.c.l.b16 %v186
    %v654 = vunpack.c.h.b16 %v186
    %v655 = vunpack.c.l.b16 %v187
    %v656 = vunpack.c.l.b16 %v188
    %v657 = vunpack.c.h.b16 %v188
    %v658 = vunpack.c.l.b16 %v189
    %v659 = vunpack.c.l.b16 %v190
    %v660 = vunpack.c.h.b16 %v190
    %v661 = vunpack.c.l.b16 %v191
    %v662 = vunpack.c.l.b16 %v192
    %v663 = vunpack.c.h.b16 %v192
    %v664 = vunpack.c.l.b16 %v193
    %v665 = vunpack.c.l.b16 %v194
    %v666 = vunpack.c.h.b16 %v194
    %v667 = vunpack.c.l.b16 %v195
    %v668 = vunpack.c.l.b16 %v196
    %v669 = vunpack.c.h.b16 %v196
    %v670 = vunpack.c.l.b16 %v197
    %v671 = vunpack.c.l.b16 %v198
    %v672 = vunpack.c.h.b16 %v198
    %v673 = vunpack.c.l.b16 %v199
    %v674 = vunpack.c.l.b16 %v200
    %v675 = vunpack.c.h.b16 %v200
    %v676 = vunpack.c.l.b16 %v201
    %v677 = vunpack.c.l.b16 %v202
    %v678 = vunpack.c.h.b16 %v202
    %v679 = vunpack.c.l.b16 %v203
    %v680 = vunpack.c.l.b16 %v204
    %v681 = vunpack.c.h.b16 %v204
    %v682 = vunpack.c.l.b16 %v205
    %v683 = vunpack.c.l.b16 %v206
    %v684 = vunpack.c.h.b16 %v206
    %v685 = vunpack.c.l.b16 %v207
    %v686 = vunpack.c.l.b16 %v208
    %v687 = vunpack.c.h.b16 %v208
    %v688 = vunpack.c.l.b16 %v209
    %v689 = vunpack.c.l.b16 %v210
    %v690 = vunpack.c.h.b16 %v210
    %v691 = vunpack.c.l.b16 %v211
    %v692 = vunpack.c.l.b16 %v212
    %v693 = vunpack.c.h.b16 %v212
    %v694 = vunpack.c.l.b16 %v213
    %v695 = vunpack.c.l.b16 %v214
    %v696 = vunpack.c.h.b16 %v214
    %v697 = vunpack.c.l.b16 %v215
    %v698 = vunpack.c.l.b16 %v216
    %v699 = vunpack.c.h.b16 %v216
    %v700 = vunpack.c.l.b16 %v217
    %v701 = vunpack.c.l.b16 %v218
    %v702 = vunpack.c.h.b16 %v218
    %v703 = vunpack.c.l.b16 %v219
    %v704 = vunpack.c.l.b16 %v220
    %v705 = vunpack.c.h.b16 %v220
    %v706 = vunpack.c.l.b16 %v221
    %v707 = vunpack.c.l.b16 %v222
    %v708 = vunpack.c.h.b16 %v222
    %v709 = vunpack.c.l.b16 %v223
    %v710 = vunpack.c.l.b16 %v224
    %v711 = vunpack.c.h.b16 %v224
    %v712 = vunpack.c.l.b16 %v225
    %v713 = vunpack.c.l.b16 %v226
    %v714 = vunpack.c.h.b16 %v226
    %v715 = vunpack.c.l.b16 %v227
    %v716 = vunpack.c.l.b16 %v228
    %v717 = vunpack.c.h.b16 %v228
    %v718 = vunpack.c.l.b16 %v229
    %v719 = vunpack.c.l.b16 %v230
    %v720 = vunpack.c.h.b16 %v230
    %v721 = vunpack.c.l.b16 %v231
    %v722 = vunpack.c.l.b16 %v232
    %v723 = vunpack.c.h.b16 %v232
    %v724 = vunpack.c.l.b16 %v233
    %v725 = vunpack.c.l.b16 %v234
    %v726 = vunpack.c.h.b16 %v234
    %v727 = vunpack.c.l.b16 %v235
    %v728 = vunpack.c.l.b16 %v236
    %v729 = vunpack.c.h.b16 %v236
    %v730 = vunpack.c.l.b16 %v237
    %v731 = vunpack.c.l.b16 %v238
    %v732 = vunpack.c.h.b16 %v238
    %v733 = vunpack.c.l.b16 %v239
    %v734 = vunpack.c.l.b16 %v240
    %v735 = vunpack.c.h.b16 %v240
    %v736 = vunpack.c.l.b16 %v241
    %v737 = vunpack.c.l.b16 %v242
    %v738 = vunpack.c.h.b16 %v242
    %v739 = vunpack.c.l.b16 %v243
    %v740 = vunpack.c.l.b16 %v244
    %v741 = vunpack.c.h.b16 %v244
    %v742 = vunpack.c.l.b16 %v245
    %v743 = vunpack.c.l.b16 %v246
    %v744 = vunpack.c.h.b16 %v246
    %v745 = vunpack.c.l.b16 %v247
    %v746 = vunpack.c.l.b16 %v248
    %v747 = vunpack.c.h.b16 %v248
    %v748 = vunpack.c.l.b16 %v249
    %v749 = vunpack.c.l.b16 %v250
    %v750 = vunpack.c.h.b16 %v250
    %v751 = vunpack.c.l.b16 %v251
    %v752 = vunpack.c.l.b16 %v252
    %v753 = vunpack.c.h.b16 %v252
    %v754 = vunpack.c.l.b16 %v253
    %v755 = vunpack.c.l.b16 %v254
    %v756 = vunpack.c.h.b16 %v254
    %v757 = vunpack.c.l.b16 %v255
    %v758 = vunpack.c.l.b16 %v256
    %v759 = vunpack.c.h.b16 %v256
    %v760 = vunpack.c.l.b16 %v257
    %v761 = vunpack.c.l.b16 %v258
    %v762 = vunpack.c.h.b16 %v258
    %v763 = vunpack.c.l.b16 %v259
    %v764 = vunpack.c.l.b16 %v260
    %v765 = vunpack.c.h.b16 %v260
    %v766 = vunpack.c.l.b16 %v261
    %v767 = vpack.c.b16 %v476, %v473
    %v768 = vpack.c.b16 %v477, %v474
    %v769 = vpack.c.b16 %v478, %v475
    %v770 = vpack.c.b16 %v482, %v479
    %v771 = vpack.c.b16 %v483, %v480
    %v772 = vpack.c.b16 %v484, %v481
    %v773 = vpack.c.b16 %v488, %v485
    %v774 = vpack.c.b16 %v489, %v486
    %v775 = vpack.c.b16 %v490, %v487
    %v776 = vpack.c.b16 %v494, %v491
    %v777 = vpack.c.b16 %v495, %v492
    %v778 = vpack.c.b16 %v496, %v493
    %v779 = vpack.c.b16 %v500, %v497
    %v780 = vpack.c.b16 %v501, %v498
    %v781 = vpack.c.b16 %v502, %v499
    %v782 = vpack.c.b16 %v506, %v503
    %v783 = vpack.c.b16 %v507, %v504
    %v784 = vpack.c.b16 %v508, %v505
    %v785 = vpack.c.b16 %v512, %v509
    %v786 = vpack.c.b16 %v513, %v510
    %v787 = vpack.c.b16 %v514, %v511
    %v788 = vpack.c.b16 %v518, %v515
    %v789 = vpack.c.b16 %v519, %v516
    %v790 = vpack.c.b16 %v520, %v517
    %v791 = vpack.c.b16 %v524, %v521
    %v792 = vpack.c.b16 %v525, %v522
    %v793 = vpack.c.b16 %v526, %v523
    %v794 = vpack.c.b16 %v530, %v527
    %v795 = vpack.c.b16 %v531, %v528
    %v796 = vpack.c.b16 %v532, %v529
    %v797 = vpack.c.b16 %v536, %v533
    %v798 = vpack.c.b16 %v537, %v534
    %v799 = vpack.c.b16 %v538, %v535
    %v800 = vpack.c.b16 %v542, %v539
    %v801 = vpack.c.b16 %v543, %v540
    %v802 = vpack.c.b16 %v544, %v541
    %v803 = vpack.c.b16 %v548, %v545
    %v804 = vpack.c.b16 %v549, %v546
    %v805 = vpack.c.b16 %v550, %v547
    %v806 = vpack.c.b16 %v554, %v551
    %v807 = vpack.c.b16 %v555, %v552
    %v808 = vpack.c.b16 %v556, %v553
    %v809 = vpack.c.b16 %v560, %v557
    %v810 = vpack.c.b16 %v561, %v558
    %v811 = vpack.c.b16 %v562, %v559
    %v812 = vpack.c.b16 %v566, %v563
    %v813 = vpack.c.b16 %v567, %v564
    %v814 = vpack.c.b16 %v568, %v565
    %v815 = vpack.c.b16 %v572, %v569
    %v816 = vpack.c.b16 %v573, %v570
    %v817 = vpack.c.b16 %v574, %v571
    %v818 = vpack.c.b16 %v578, %v575
    %v819 = vpack.c.b16 %v579, %v576
    %v820 = vpack.c.b16 %v580, %v577
    %v821 = vpack.c.b16 %v584, %v581
    %v822 = vpack.c.b16 %v585, %v582
    %v823 = vpack.c.b16 %v586, %v583
    %v824 = vpack.c.b16 %v590, %v587
    %v825 = vpack.c.b16 %v591, %v588
    %v826 = vpack.c.b16 %v592, %v589
    %v827 = vpack.c.b16 %v596, %v593
    %v828 = vpack.c.b16 %v597, %v594
    %v829 = vpack.c.b16 %v598, %v595
    %v830 = vpack.c.b16 %v602, %v599
    %v831 = vpack.c.b16 %v603, %v600
    %v832 = vpack.c.b16 %v604, %v601
    %v833 = vpack.c.b16 %v608, %v605
    %v834 = vpack.c.b16 %v609, %v606
    %v835 = vpack.c.b16 %v610, %v607
    %v836 = vpack.c.b16 %v614, %v611
    %v837 = vpack.c.b16 %v615, %v612
    %v838 = vpack.c.b16 %v616, %v613
    %v839 = vpack.c.b16 %v620, %v617
    %v840 = vpack.c.b16 %v621, %v618
    %v841 = vpack.c.b16 %v622, %v619
    %v842 = vpack.c.b16 %v626, %v623
    %v843 = vpack.c.b16 %v627, %v624
    %v844 = vpack.c.b16 %v628, %v625
    %v845 = vpack.c.b16 %v632, %v629
    %v846 = vpack.c.b16 %v633, %v630
    %v847 = vpack.c.b16 %v634, %v631
    %v848 = vpack.c.b16 %v638, %v635
    %v849 = vpack.c.b16 %v639, %v636
    %v850 = vpack.c.b16 %v640, %v637
    %v851 = vpack.c.b16 %v644, %v641
    %v852 = vpack.c.b16 %v645, %v642
    %v853 = vpack.c.b16 %v646, %v643
    %v854 = vpack.c.b16 %v650, %v647
    %v855 = vpack.c.b16 %v651, %v648
    %v856 = vpack.c.b16 %v652, %v649
    %v857 = vpack.c.b16 %v656, %v653
    %v858 = vpack.c.b16 %v657, %v654
    %v859 = vpack.c.b16 %v658, %v655
    %v860 = vpack.c.b16 %v662, %v659
    %v861 = vpack.c.b16 %v663, %v660
    %v862 = vpack.c.b16 %v664, %v661
    %v863 = vpack.c.b16 %v668, %v665
    %v864 = vpack.c.b16 %v669, %v666
    %v865 = vpack.c.b16 %v670, %v667
    %v866 = vpack.c.b16 %v674, %v671
    %v867 = vpack.c.b16 %v675, %v672
    %v868 = vpack.c.b16 %v676, %v673
    %v869 = vpack.c.b16 %v680, %v677
    %v870 = vpack.c.b16 %v681, %v678
    %v871 = vpack.c.b16 %v682, %v679
    %v872 = vpack.c.b16 %v686, %v683
    %v873 = vpack.c.b16 %v687, %v684
    %v874 = vpack.c.b16 %v688, %v685
    %v875 = vpack.c.b16 %v692, %v689
    %v876 = vpack.c.b16 %v693, %v690
    %v877 = vpack.c.b16 %v694, %v691
    %v878 = vpack.c.b16 %v698, %v695
    %v879 = vpack.c.b16 %v699, %v696
    %v880 = vpack.c.b16 %v700, %v697
    %v881 = vpack.c.b16 %v704, %v701
    %v882 = vpack.c.b16 %v705, %v702
    %v883 = vpack.c.b16 %v706, %v703
    %v884 = vpack.c.b16 %v710, %v707
    %v885 = vpack.c.b16 %v711, %v708
    %v886 = vpack.c.b16 %v712, %v709
    %v887 = vpack.c.b16 %v716, %v713
    %v888 = vpack.c.b16 %v717, %v714
    %v889 = vpack.c.b16 %v718, %v715
    %v890 = vpack.c.b16 %v722, %v719
    %v891 = vpack.c.b16 %v723, %v720
    %v892 = vpack.c.b16 %v724, %v721
    %v893 = vpack.c.b16 %v728, %v725
    %v894 = vpack.c.b16 %v729, %v726
    %v895 = vpack.c.b16 %v730, %v727
    %v896 = vpack.c.b16 %v734, %v731
    %v897 = vpack.c.b16 %v735, %v732
    %v898 = vpack.c.b16 %v736, %v733
    %v899 = vpack.c.b16 %v740, %v737
    %v900 = vpack.c.b16 %v741, %v738
    %v901 = vpack.c.b16 %v742, %v739
    %v902 = vpack.c.b16 %v746, %v743
    %v903 = vpack.c.b16 %v747, %v744
    %v904 = vpack.c.b16 %v748, %v745
    %v905 = vpack.c.b16 %v752, %v749
    %v906 = vpack.c.b16 %v753, %v750
    %v907 = vpack.c.b16 %v754, %v751
    %v908 = vpack.c.b16 %v758, %v755
    %v909 = vpack.c.b16 %v759, %v756
    %v910 = vpack.c.b16 %v760, %v757
    %v911 = vpack.c.b16 %v764, %v761
    %v912 = vpack.c.b16 %v765, %v762
    %v913 = vpack.c.b16 %v766, %v763
    %vm1061 = vcmask 130048
    %v1063 = vsel %vm1061, %v269, 0
    %1065 = vmatpush.bf16.msra.mxu0 %v788
    %1066 = vmatpush.bf16.msra.mxu0 %v785
    %1067 = vmatpush.bf16.msra.mxu0 %v782
    %1068 = vmatpush.bf16.msra.mxu0 %v779
    %1069 = vmatpush.bf16.msra.mxu0 %v776
    %1070 = vmatpush.bf16.msra.mxu0 %v773
    %1071 = vmatpush.bf16.msra.mxu0 %v770
    %1072 = vmatpush.bf16.msra.mxu0 %v767
    %1073 = vmatmul.bf16.gmra.mxu0 %v263
    %v1074 = vpop.f32.mrf.mxu0
    %v1075 = vadd.f32 %v271, %v1074
    %v1076 = vpop.f32.mrf.mxu0
    %1077 = vdwg.mxu0
    %1078 = vmatpush.bf16.msra.mxu0 %v812
    %1079 = vmatpush.bf16.msra.mxu0 %v809
    %1080 = vmatpush.bf16.msra.mxu0 %v806
    %1081 = vmatpush.bf16.msra.mxu0 %v803
    %1082 = vmatpush.bf16.msra.mxu0 %v800
    %1083 = vmatpush.bf16.msra.mxu0 %v797
    %1084 = vmatpush.bf16.msra.mxu0 %v794
    %1085 = vmatpush.bf16.msra.mxu0 %v791
    %1086 = vmatmul.bf16.gmra.mxu0 %v264
    %v1087 = vpop.f32.mrf.mxu0
    %v1088 = vadd.f32 %v1075, %v1087
    %v1089 = vpop.f32.mrf.mxu0
    %1090 = vdwg.mxu0
    %1091 = vmatpush.bf16.msra.mxu0 %v836
    %1092 = vmatpush.bf16.msra.mxu0 %v833
    %1093 = vmatpush.bf16.msra.mxu0 %v830
    %1094 = vmatpush.bf16.msra.mxu0 %v827
    %1095 = vmatpush.bf16.msra.mxu0 %v824
    %1096 = vmatpush.bf16.msra.mxu0 %v821
    %1097 = vmatpush.bf16.msra.mxu0 %v818
    %1098 = vmatpush.bf16.msra.mxu0 %v815
    %1099 = vmatmul.bf16.gmra.mxu0 %v265
    %v1100 = vpop.f32.mrf.mxu0
    %v1101 = vadd.f32 %v1088, %v1100
    %v1102 = vpop.f32.mrf.mxu0
    %1103 = vdwg.mxu0
    %1104 = vmatpush.bf16.msra.mxu0 %v860
    %1105 = vmatpush.bf16.msra.mxu0 %v857
    %1106 = vmatpush.bf16.msra.mxu0 %v854
    %1107 = vmatpush.bf16.msra.mxu0 %v851
    %1108 = vmatpush.bf16.msra.mxu0 %v848
    %1109 = vmatpush.bf16.msra.mxu0 %v845
    %1110 = vmatpush.bf16.msra.mxu0 %v842
    %1111 = vmatpush.bf16.msra.mxu0 %v839
    %1112 = vmatmul.bf16.gmra.mxu0 %v266
    %v1113 = vpop.f32.mrf.mxu0
    %v1114 = vadd.f32 %v1101, %v1113
    %v1115 = vpop.f32.mrf.mxu0
    %1116 = vdwg.mxu0
    %1117 = vmatpush.bf16.msra.mxu0 %v884
    %1118 = vmatpush.bf16.msra.mxu0 %v881
    %1119 = vmatpush.bf16.msra.mxu0 %v878
    %1120 = vmatpush.bf16.msra.mxu0 %v875
    %1121 = vmatpush.bf16.msra.mxu0 %v872
    %1122 = vmatpush.bf16.msra.mxu0 %v869
    %1123 = vmatpush.bf16.msra.mxu0 %v866
    %1124 = vmatpush.bf16.msra.mxu0 %v863
    %1125 = vmatmul.bf16.gmra.mxu0 %v267
    %v1126 = vpop.f32.mrf.mxu0
    %v1127 = vadd.f32 %v1114, %v1126
    %v1128 = vpop.f32.mrf.mxu0
    %1129 = vdwg.mxu0
    %1130 = vmatpush.bf16.msra.mxu0 %v908
    %1131 = vmatpush.bf16.msra.mxu0 %v905
    %1132 = vmatpush.bf16.msra.mxu0 %v902
    %1133 = vmatpush.bf16.msra.mxu0 %v899
    %1134 = vmatpush.bf16.msra.mxu0 %v896
    %1135 = vmatpush.bf16.msra.mxu0 %v893
    %1136 = vmatpush.bf16.msra.mxu0 %v890
    %1137 = vmatpush.bf16.msra.mxu0 %v887
    %1138 = vmatmul.bf16.gmra.mxu0 %v268
    %v1139 = vpop.f32.mrf.mxu0
    %v1140 = vadd.f32 %v1127, %v1139
    %v1141 = vpop.f32.mrf.mxu0
    %1142 = vdwg.mxu0
    %1143 = vmatpush.bf16.msra.mxu0 0
    %1144 = vmatpush.bf16.msra.mxu0 0
    %1145 = vmatpush.bf16.msra.mxu0 0
    %1146 = vmatpush.bf16.msra.mxu0 0
    %1147 = vmatpush.bf16.msra.mxu0 0
    %1148 = vmatpush.bf16.msra.mxu0 0
    %1149 = vmatpush.bf16.msra.mxu0 0
    %1150 = vmatpush.bf16.msra.mxu0 %v911
    %1151 = vmatmul.bf16.gmra.mxu0 %v1063
    %v1152 = vpop.f32.mrf.mxu0
    %v1153 = vadd.f32 %v1140, %v1152
    %v1154 = vpop.f32.mrf.mxu0
    %1155 = vdwg.mxu0
    %1156 = vmatpush.bf16.msra.mxu0 %v789
    %1157 = vmatpush.bf16.msra.mxu0 %v786
    %1158 = vmatpush.bf16.msra.mxu0 %v783
    %1159 = vmatpush.bf16.msra.mxu0 %v780
    %1160 = vmatpush.bf16.msra.mxu0 %v777
    %1161 = vmatpush.bf16.msra.mxu0 %v774
    %1162 = vmatpush.bf16.msra.mxu0 %v771
    %1163 = vmatpush.bf16.msra.mxu0 %v768
    %1164 = vmatmul.bf16.gmra.mxu0 %v263
    %v1165 = vpop.f32.mrf.mxu0
    %v1166 = vadd.f32 %v272, %v1165
    %v1167 = vpop.f32.mrf.mxu0
    %1168 = vdwg.mxu0
    %1169 = vmatpush.bf16.msra.mxu0 %v813
    %1170 = vmatpush.bf16.msra.mxu0 %v810
    %1171 = vmatpush.bf16.msra.mxu0 %v807
    %1172 = vmatpush.bf16.msra.mxu0 %v804
    %1173 = vmatpush.bf16.msra.mxu0 %v801
    %1174 = vmatpush.bf16.msra.mxu0 %v798
    %1175 = vmatpush.bf16.msra.mxu0 %v795
    %1176 = vmatpush.bf16.msra.mxu0 %v792
    %1177 = vmatmul.bf16.gmra.mxu0 %v264
    %v1178 = vpop.f32.mrf.mxu0
    %v1179 = vadd.f32 %v1166, %v1178
    %v1180 = vpop.f32.mrf.mxu0
    %1181 = vdwg.mxu0
    %1182 = vmatpush.bf16.msra.mxu0 %v837
    %1183 = vmatpush.bf16.msra.mxu0 %v834
    %1184 = vmatpush.bf16.msra.mxu0 %v831
    %1185 = vmatpush.bf16.msra.mxu0 %v828
    %1186 = vmatpush.bf16.msra.mxu0 %v825
    %1187 = vmatpush.bf16.msra.mxu0 %v822
    %1188 = vmatpush.bf16.msra.mxu0 %v819
    %1189 = vmatpush.bf16.msra.mxu0 %v816
    %1190 = vmatmul.bf16.gmra.mxu0 %v265
    %v1191 = vpop.f32.mrf.mxu0
    %v1192 = vadd.f32 %v1179, %v1191
    %v1193 = vpop.f32.mrf.mxu0
    %1194 = vdwg.mxu0
    %1195 = vmatpush.bf16.msra.mxu0 %v861
    %1196 = vmatpush.bf16.msra.mxu0 %v858
    %1197 = vmatpush.bf16.msra.mxu0 %v855
    %1198 = vmatpush.bf16.msra.mxu0 %v852
    %1199 = vmatpush.bf16.msra.mxu0 %v849
    %1200 = vmatpush.bf16.msra.mxu0 %v846
    %1201 = vmatpush.bf16.msra.mxu0 %v843
    %1202 = vmatpush.bf16.msra.mxu0 %v840
    %1203 = vmatmul.bf16.gmra.mxu0 %v266
    %v1204 = vpop.f32.mrf.mxu0
    %v1205 = vadd.f32 %v1192, %v1204
    %v1206 = vpop.f32.mrf.mxu0
    %1207 = vdwg.mxu0
    %1208 = vmatpush.bf16.msra.mxu0 %v885
    %1209 = vmatpush.bf16.msra.mxu0 %v882
    %1210 = vmatpush.bf16.msra.mxu0 %v879
    %1211 = vmatpush.bf16.msra.mxu0 %v876
    %1212 = vmatpush.bf16.msra.mxu0 %v873
    %1213 = vmatpush.bf16.msra.mxu0 %v870
    %1214 = vmatpush.bf16.msra.mxu0 %v867
    %1215 = vmatpush.bf16.msra.mxu0 %v864
    %1216 = vmatmul.bf16.gmra.mxu0 %v267
    %v1217 = vpop.f32.mrf.mxu0
    %v1218 = vadd.f32 %v1205, %v1217
    %v1219 = vpop.f32.mrf.mxu0
    %1220 = vdwg.mxu0
    %1221 = vmatpush.bf16.msra.mxu0 %v909
    %1222 = vmatpush.bf16.msra.mxu0 %v906
    %1223 = vmatpush.bf16.msra.mxu0 %v903
    %1224 = vmatpush.bf16.msra.mxu0 %v900
    %1225 = vmatpush.bf16.msra.mxu0 %v897
    %1226 = vmatpush.bf16.msra.mxu0 %v894
    %1227 = vmatpush.bf16.msra.mxu0 %v891
    %1228 = vmatpush.bf16.msra.mxu0 %v888
    %1229 = vmatmul.bf16.gmra.mxu0 %v268
    %v1230 = vpop.f32.mrf.mxu0
    %v1231 = vadd.f32 %v1218, %v1230
    %v1232 = vpop.f32.mrf.mxu0
    %1233 = vdwg.mxu0
    %1234 = vmatpush.bf16.msra.mxu0 0
    %1235 = vmatpush.bf16.msra.mxu0 0
    %1236 = vmatpush.bf16.msra.mxu0 0
    %1237 = vmatpush.bf16.msra.mxu0 0
    %1238 = vmatpush.bf16.msra.mxu0 0
    %1239 = vmatpush.bf16.msra.mxu0 0
    %1240 = vmatpush.bf16.msra.mxu0 0
    %1241 = vmatpush.bf16.msra.mxu0 %v912
    %1242 = vmatmul.bf16.gmra.mxu0 %v1063
    %v1243 = vpop.f32.mrf.mxu0
    %v1244 = vadd.f32 %v1231, %v1243
    %v1245 = vpop.f32.mrf.mxu0
    %1246 = vdwg.mxu0
    %1247 = vmatpush.bf16.msra.mxu0 %v790
    %1248 = vmatpush.bf16.msra.mxu0 %v787
    %1249 = vmatpush.bf16.msra.mxu0 %v784
    %1250 = vmatpush.bf16.msra.mxu0 %v781
    %1251 = vmatpush.bf16.msra.mxu0 %v778
    %1252 = vmatpush.bf16.msra.mxu0 %v775
    %1253 = vmatpush.bf16.msra.mxu0 %v772
    %1254 = vmatpush.bf16.msra.mxu0 %v769
    %1255 = vmatmul.bf16.gmra.mxu0 %v263
    %v1256 = vpop.f32.mrf.mxu0
    %v1257 = vadd.f32 %v273, %v1256
    %v1258 = vpop.f32.mrf.mxu0
    %1259 = vdwg.mxu0
    %1260 = vmatpush.bf16.msra.mxu0 %v814
    %1261 = vmatpush.bf16.msra.mxu0 %v811
    %1262 = vmatpush.bf16.msra.mxu0 %v808
    %1263 = vmatpush.bf16.msra.mxu0 %v805
    %1264 = vmatpush.bf16.msra.mxu0 %v802
    %1265 = vmatpush.bf16.msra.mxu0 %v799
    %1266 = vmatpush.bf16.msra.mxu0 %v796
    %1267 = vmatpush.bf16.msra.mxu0 %v793
    %1268 = vmatmul.bf16.gmra.mxu0 %v264
    %v1269 = vpop.f32.mrf.mxu0
    %v1270 = vadd.f32 %v1257, %v1269
    %v1271 = vpop.f32.mrf.mxu0
    %1272 = vdwg.mxu0
    %1273 = vmatpush.bf16.msra.mxu0 %v838
    %1274 = vmatpush.bf16.msra.mxu0 %v835
    %1275 = vmatpush.bf16.msra.mxu0 %v832
    %1276 = vmatpush.bf16.msra.mxu0 %v829
    %1277 = vmatpush.bf16.msra.mxu0 %v826
    %1278 = vmatpush.bf16.msra.mxu0 %v823
    %1279 = vmatpush.bf16.msra.mxu0 %v820
    %1280 = vmatpush.bf16.msra.mxu0 %v817
    %1281 = vmatmul.bf16.gmra.mxu0 %v265
    %v1282 = vpop.f32.mrf.mxu0
    %v1283 = vadd.f32 %v1270, %v1282
    %v1284 = vpop.f32.mrf.mxu0
    %1285 = vdwg.mxu0
    %1286 = vmatpush.bf16.msra.mxu0 %v862
    %1287 = vmatpush.bf16.msra.mxu0 %v859
    %1288 = vmatpush.bf16.msra.mxu0 %v856
    %1289 = vmatpush.bf16.msra.mxu0 %v853
    %1290 = vmatpush.bf16.msra.mxu0 %v850
    %1291 = vmatpush.bf16.msra.mxu0 %v847
    %1292 = vmatpush.bf16.msra.mxu0 %v844
    %1293 = vmatpush.bf16.msra.mxu0 %v841
    %1294 = vmatmul.bf16.gmra.mxu0 %v266
    %v1295 = vpop.f32.mrf.mxu0
    %v1296 = vadd.f32 %v1283, %v1295
    %v1297 = vpop.f32.mrf.mxu0
    %1298 = vdwg.mxu0
    %1299 = vmatpush.bf16.msra.mxu0 %v886
    %1300 = vmatpush.bf16.msra.mxu0 %v883
    %1301 = vmatpush.bf16.msra.mxu0 %v880
    %1302 = vmatpush.bf16.msra.mxu0 %v877
    %1303 = vmatpush.bf16.msra.mxu0 %v874
    %1304 = vmatpush.bf16.msra.mxu0 %v871
    %1305 = vmatpush.bf16.msra.mxu0 %v868
    %1306 = vmatpush.bf16.msra.mxu0 %v865
    %1307 = vmatmul.bf16.gmra.mxu0 %v267
    %v1308 = vpop.f32.mrf.mxu0
    %v1309 = vadd.f32 %v1296, %v1308
    %v1310 = vpop.f32.mrf.mxu0
    %1311 = vdwg.mxu0
    %1312 = vmatpush.bf16.msra.mxu0 %v910
    %1313 = vmatpush.bf16.msra.mxu0 %v907
    %1314 = vmatpush.bf16.msra.mxu0 %v904
    %1315 = vmatpush.bf16.msra.mxu0 %v901
    %1316 = vmatpush.bf16.msra.mxu0 %v898
    %1317 = vmatpush.bf16.msra.mxu0 %v895
    %1318 = vmatpush.bf16.msra.mxu0 %v892
    %1319 = vmatpush.bf16.msra.mxu0 %v889
    %1320 = vmatmul.bf16.gmra.mxu0 %v268
    %v1321 = vpop.f32.mrf.mxu0
    %v1322 = vadd.f32 %v1309, %v1321
    %v1323 = vpop.f32.mrf.mxu0
    %1324 = vdwg.mxu0
    %1325 = vmatpush.bf16.msra.mxu0 0
    %1326 = vmatpush.bf16.msra.mxu0 0
    %1327 = vmatpush.bf16.msra.mxu0 0
    %1328 = vmatpush.bf16.msra.mxu0 0
    %1329 = vmatpush.bf16.msra.mxu0 0
    %1330 = vmatpush.bf16.msra.mxu0 0
    %1331 = vmatpush.bf16.msra.mxu0 0
    %1332 = vmatpush.bf16.msra.mxu0 %v913
    %1333 = vmatmul.bf16.gmra.mxu0 %v1063
    %v1334 = vpop.f32.mrf.mxu0
    %v1335 = vadd.f32 %v1322, %v1334
    %v1336 = vpop.f32.mrf.mxu0
    %1337 = vdwg.mxu0
    %v1338 = vmax.f32 %v1153, 0.0
    %v1339 = vmax.f32 %v1244, 0.0
    %v1340 = vmax.f32 %v1335, 0.0
    %v1341 = vld [vmem:[#allocation4] sm:$0xf]
    %v1342 = vld [vmem:[#allocation4 + $0x4] sm:$0xf]
    %v1343 = vld [vmem:[#allocation4 + $0x8] sm:$0xf]
    %v1344 = vld [vmem:[#allocation4 + $0xc] sm:$0xf]
    %v1345 = vld [vmem:[#allocation4 + $0x10] sm:$0xf]
    %v1346 = vld [vmem:[#allocation4 + $0x14] sm:$0xf]
    %v1347 = vld [vmem:[#allocation4 + $0x18] sm:$0xf]
    %v1348 = vld [vmem:[#allocation4 + $0x1c] sm:$0xf]
    %v1349 = vld [vmem:[#allocation4 + $0x20] sm:$0xf]
    %v1350 = vld [vmem:[#allocation4 + $0x24] sm:$0xf]
    %v1351 = vld [vmem:[#allocation4 + $0x28] sm:$0xf]
    %v1352 = vld [vmem:[#allocation4 + $0x2c] sm:$0xf]
    %v1353 = vld [vmem:[#allocation4 + $0x30] sm:$0xf]
    %v1354 = vld [vmem:[#allocation4 + $0x34] sm:$0xf]
    %v1355 = vld [vmem:[#allocation4 + $0x38] sm:$0xf]
    %v1356 = vld [vmem:[#allocation4 + $0x3c] sm:$0xf]
    %v1357 = vld [vmem:[#allocation4 + $0x40] sm:$0xf]
    %v1358 = vld [vmem:[#allocation4 + $0x44] sm:$0xf]
    %v1359 = vld [vmem:[#allocation4 + $0x48] sm:$0xf]
    %v1360 = vld [vmem:[#allocation4 + $0x4c] sm:$0xf]
    %v1361 = vld [vmem:[#allocation4 + $0x50] sm:$0xf]
    %v1362 = vld [vmem:[#allocation4 + $0x54] sm:$0xf]
    %v1363 = vld [vmem:[#allocation4 + $0x58] sm:$0xf]
    %v1364 = vld [vmem:[#allocation4 + $0x5c] sm:$0xf]
    %v1365 = vld [vmem:[#allocation4 + $0x60] sm:$0xf]
    %v1366 = vld [vmem:[#allocation4 + $0x64] sm:$0xf]
    %v1367 = vld [vmem:[#allocation4 + $0x68] sm:$0xf]
    %v1368 = vld [vmem:[#allocation4 + $0x6c] sm:$0xf]
    %v1369 = vld [vmem:[#allocation4 + $0x70] sm:$0xf]
    %v1370 = vld [vmem:[#allocation4 + $0x74] sm:$0xf]
    %v1371 = vld [vmem:[#allocation4 + $0x78] sm:$0xf]
    %v1372 = vld [vmem:[#allocation4 + $0x7c] sm:$0xf]
    %v1373 = vld [vmem:[#allocation4 + $0x80] sm:$0xf]
    %v1374 = vld [vmem:[#allocation4 + $0x84] sm:$0xf]
    %v1375 = vld [vmem:[#allocation4 + $0x88] sm:$0xf]
    %v1376 = vld [vmem:[#allocation4 + $0x8c] sm:$0xf]
    %v1377 = vld [vmem:[#allocation4 + $0x90] sm:$0xf]
    %v1378 = vld [vmem:[#allocation4 + $0x94] sm:$0xf]
    %v1379 = vld [vmem:[#allocation4 + $0x98] sm:$0xf]
    %v1380 = vld [vmem:[#allocation4 + $0x9c] sm:$0xf]
    %v1381 = vld [vmem:[#allocation4 + $0xa0] sm:$0xf]
    %v1382 = vld [vmem:[#allocation4 + $0xa4] sm:$0xf]
    %v1383 = vld [vmem:[#allocation4 + $0xa8] sm:$0xf]
    %v1384 = vld [vmem:[#allocation4 + $0xac] sm:$0xf]
    %v1385 = vld [vmem:[#allocation4 + $0xb0] sm:$0xf]
    %v1386 = vld [vmem:[#allocation4 + $0xb4] sm:$0xf]
    %v1387 = vld [vmem:[#allocation4 + $0xb8] sm:$0xf]
    %v1388 = vld [vmem:[#allocation4 + $0xbc] sm:$0xf]
    %v1389 = vld [vmem:[%s4] sm:$0x1]
    %v1390 = vpack.c.bf16 %v1338, %v1338
    %v1391 = vpack.c.bf16 %v1339, %v1339
    %v1392 = vpack.c.bf16 %v1340, %v1340
    %v1394 = vperm.slane %v1389, 0
    %v1444 = vunpack.c.l.b16 %v1341
    %v1445 = vunpack.c.l.b16 %v1342
    %v1446 = vunpack.c.l.b16 %v1343
    %v1447 = vunpack.c.l.b16 %v1344
    %v1448 = vunpack.c.l.b16 %v1345
    %v1449 = vunpack.c.l.b16 %v1346
    %v1450 = vunpack.c.l.b16 %v1347
    %v1451 = vunpack.c.l.b16 %v1348
    %v1452 = vunpack.c.l.b16 %v1349
    %v1453 = vunpack.c.l.b16 %v1350
    %v1454 = vunpack.c.l.b16 %v1351
    %v1455 = vunpack.c.l.b16 %v1352
    %v1456 = vunpack.c.l.b16 %v1353
    %v1457 = vunpack.c.l.b16 %v1354
    %v1458 = vunpack.c.l.b16 %v1355
    %v1459 = vunpack.c.l.b16 %v1356
    %v1460 = vunpack.c.l.b16 %v1357
    %v1461 = vunpack.c.l.b16 %v1358
    %v1462 = vunpack.c.l.b16 %v1359
    %v1463 = vunpack.c.l.b16 %v1360
    %v1464 = vunpack.c.l.b16 %v1361
    %v1465 = vunpack.c.l.b16 %v1362
    %v1466 = vunpack.c.l.b16 %v1363
    %v1467 = vunpack.c.l.b16 %v1364
    %v1468 = vunpack.c.l.b16 %v1365
    %v1469 = vunpack.c.l.b16 %v1366
    %v1470 = vunpack.c.l.b16 %v1367
    %v1471 = vunpack.c.l.b16 %v1368
    %v1472 = vunpack.c.l.b16 %v1369
    %v1473 = vunpack.c.l.b16 %v1370
    %v1474 = vunpack.c.l.b16 %v1371
    %v1475 = vunpack.c.l.b16 %v1372
    %v1476 = vunpack.c.l.b16 %v1373
    %v1477 = vunpack.c.l.b16 %v1374
    %v1478 = vunpack.c.l.b16 %v1375
    %v1479 = vunpack.c.l.b16 %v1376
    %v1480 = vunpack.c.l.b16 %v1377
    %v1481 = vunpack.c.l.b16 %v1378
    %v1482 = vunpack.c.l.b16 %v1379
    %v1483 = vunpack.c.l.b16 %v1380
    %v1484 = vunpack.c.l.b16 %v1381
    %v1485 = vunpack.c.l.b16 %v1382
    %v1486 = vunpack.c.l.b16 %v1383
    %v1487 = vunpack.c.l.b16 %v1384
    %v1488 = vunpack.c.l.b16 %v1385
    %v1489 = vunpack.c.l.b16 %v1386
    %v1490 = vunpack.c.l.b16 %v1387
    %v1491 = vunpack.c.l.b16 %v1388
    %v1492 = vpack.c.b16 %v1445, %v1444
    %v1493 = vpack.c.b16 %v1447, %v1446
    %v1494 = vpack.c.b16 %v1449, %v1448
    %v1495 = vpack.c.b16 %v1451, %v1450
    %v1496 = vpack.c.b16 %v1453, %v1452
    %v1497 = vpack.c.b16 %v1455, %v1454
    %v1498 = vpack.c.b16 %v1457, %v1456
    %v1499 = vpack.c.b16 %v1459, %v1458
    %v1500 = vpack.c.b16 %v1461, %v1460
    %v1501 = vpack.c.b16 %v1463, %v1462
    %v1502 = vpack.c.b16 %v1465, %v1464
    %v1503 = vpack.c.b16 %v1467, %v1466
    %v1504 = vpack.c.b16 %v1469, %v1468
    %v1505 = vpack.c.b16 %v1471, %v1470
    %v1506 = vpack.c.b16 %v1473, %v1472
    %v1507 = vpack.c.b16 %v1475, %v1474
    %v1508 = vpack.c.b16 %v1477, %v1476
    %v1509 = vpack.c.b16 %v1479, %v1478
    %v1510 = vpack.c.b16 %v1481, %v1480
    %v1511 = vpack.c.b16 %v1483, %v1482
    %v1512 = vpack.c.b16 %v1485, %v1484
    %v1513 = vpack.c.b16 %v1487, %v1486
    %v1514 = vpack.c.b16 %v1489, %v1488
    %v1515 = vpack.c.b16 %v1491, %v1490
    %1540 = vmatpush.bf16.msra.mxu0 %v1499
    %1541 = vmatpush.bf16.msra.mxu0 %v1498
    %1542 = vmatpush.bf16.msra.mxu0 %v1497
    %1543 = vmatpush.bf16.msra.mxu0 %v1496
    %1544 = vmatpush.bf16.msra.mxu0 %v1495
    %1545 = vmatpush.bf16.msra.mxu0 %v1494
    %1546 = vmatpush.bf16.msra.mxu0 %v1493
    %1547 = vmatpush.bf16.msra.mxu0 %v1492
    %1548 = vmatmul.bf16.gmra.mxu0 %v1390
    %v1549 = vpop.f32.mrf.mxu0
    %v1550 = vadd.f32 %v1394, %v1549
    %v1551 = vpop.f32.mrf.mxu0
    %1552 = vdwg.mxu0
    %1553 = vmatpush.bf16.msra.mxu0 %v1507
    %1554 = vmatpush.bf16.msra.mxu0 %v1506
    %1555 = vmatpush.bf16.msra.mxu0 %v1505
    %1556 = vmatpush.bf16.msra.mxu0 %v1504
    %1557 = vmatpush.bf16.msra.mxu0 %v1503
    %1558 = vmatpush.bf16.msra.mxu0 %v1502
    %1559 = vmatpush.bf16.msra.mxu0 %v1501
    %1560 = vmatpush.bf16.msra.mxu0 %v1500
    %1561 = vmatmul.bf16.gmra.mxu0 %v1391
    %v1562 = vpop.f32.mrf.mxu0
    %v1563 = vadd.f32 %v1550, %v1562
    %v1564 = vpop.f32.mrf.mxu0
    %1565 = vdwg.mxu0
    %1566 = vmatpush.bf16.msra.mxu0 %v1515
    %1567 = vmatpush.bf16.msra.mxu0 %v1514
    %1568 = vmatpush.bf16.msra.mxu0 %v1513
    %1569 = vmatpush.bf16.msra.mxu0 %v1512
    %1570 = vmatpush.bf16.msra.mxu0 %v1511
    %1571 = vmatpush.bf16.msra.mxu0 %v1510
    %1572 = vmatpush.bf16.msra.mxu0 %v1509
    %1573 = vmatpush.bf16.msra.mxu0 %v1508
    %1574 = vmatmul.bf16.gmra.mxu0 %v1392
    %v1575 = vpop.f32.mrf.mxu0
    %v1576 = vadd.f32 %v1563, %v1575
    %v1577 = vpop.f32.mrf.mxu0
    %1578 = vdwg.mxu0
    %v1579 = vmax.f32 %v1576, 0.0
    %v1580 = vld [vmem:[%s5] sm:$0xf]
    %v1581 = vld [vmem:[%s5 + $0x4] sm:$0xf]
    %v1582 = vld [vmem:[%s5 + $0x8] sm:$0xf]
    %v1583 = vld [vmem:[%s5 + $0xc] sm:$0xf]
    %v1584 = vld [vmem:[%s5 + $0x10] sm:$0xf]
    %v1585 = vld [vmem:[%s5 + $0x14] sm:$0xf]
    %v1586 = vld [vmem:[%s5 + $0x18] sm:$0xf]
    %v1587 = vld [vmem:[%s5 + $0x1c] sm:$0xf]
    %v1588 = vld [vmem:[%s5 + $0x20] sm:$0xf]
    %v1589 = vld [vmem:[%s5 + $0x24] sm:$0xf]
    %v1590 = vld [vmem:[%s5 + $0x28] sm:$0xf]
    %v1591 = vld [vmem:[%s5 + $0x2c] sm:$0xf]
    %v1592 = vld [vmem:[%s5 + $0x30] sm:$0xf]
    %v1593 = vld [vmem:[%s5 + $0x34] sm:$0xf]
    %v1594 = vld [vmem:[%s5 + $0x38] sm:$0xf]
    %v1595 = vld [vmem:[%s5 + $0x3c] sm:$0xf]
    %v1596 = vld [vmem:[%s6] sm:$0x1]
    %v1597 = vpack.c.bf16 %v1579, %v1579
    %v1599 = vperm.slane %v1596, 0
    %v1617 = vunpack.c.l.b16 %v1580
    %v1618 = vunpack.c.l.b16 %v1581
    %v1619 = vunpack.c.l.b16 %v1582
    %v1620 = vunpack.c.l.b16 %v1583
    %v1621 = vunpack.c.l.b16 %v1584
    %v1622 = vunpack.c.l.b16 %v1585
    %v1623 = vunpack.c.l.b16 %v1586
    %v1624 = vunpack.c.l.b16 %v1587
    %v1625 = vunpack.c.l.b16 %v1588
    %v1626 = vunpack.c.l.b16 %v1589
    %v1627 = vunpack.c.l.b16 %v1590
    %v1628 = vunpack.c.l.b16 %v1591
    %v1629 = vunpack.c.l.b16 %v1592
    %v1630 = vunpack.c.l.b16 %v1593
    %v1631 = vunpack.c.l.b16 %v1594
    %v1632 = vunpack.c.l.b16 %v1595
    %v1633 = vpack.c.b16 %v1618, %v1617
    %v1634 = vpack.c.b16 %v1620, %v1619
    %v1635 = vpack.c.b16 %v1622, %v1621
    %v1636 = vpack.c.b16 %v1624, %v1623
    %v1637 = vpack.c.b16 %v1626, %v1625
    %v1638 = vpack.c.b16 %v1628, %v1627
    %v1639 = vpack.c.b16 %v1630, %v1629
    %v1640 = vpack.c.b16 %v1632, %v1631
    %1649 = vmatpush.bf16.msra.mxu0 %v1640
    %1650 = vmatpush.bf16.msra.mxu0 %v1639
    %1651 = vmatpush.bf16.msra.mxu0 %v1638
    %1652 = vmatpush.bf16.msra.mxu0 %v1637
    %1653 = vmatpush.bf16.msra.mxu0 %v1636
    %1654 = vmatpush.bf16.msra.mxu0 %v1635
    %1655 = vmatpush.bf16.msra.mxu0 %v1634
    %1656 = vmatpush.bf16.msra.mxu0 %v1633
    %1657 = vmatmul.bf16.gmra.mxu0 %v1597
    %v1658 = vpop.f32.mrf.mxu0
    %v1659 = vadd.f32 %v1599, %v1658
    %v1660 = vpop.f32.mrf.mxu0
    %1661 = vdwg.mxu0
    %vm1662 = vcmask 80896
    %v1663 = vsel %vm1662, %v1659, -inf
    %1664 = vmax.xlane.f32.xlu0 %v1663
    %v1665 = vpop.xlane.xlu0 %1664
    %v1666 = vsub.f32 %v1659, %v1665
    %v1667 = vmul.f32 %v1666, 1.442695
    %v1668 = vpow.pop %v1667
    %v1669 = vsel %vm1662, %v1668, 0.0
    %1670 = vadd.xlane.f32.xlu0 %v1669
    %v1671 = vpop.xlane.xlu0 %1670
    %v1672 = vlog2.pop %v1671
    %v1673 = vmul.f32 %v1672, 0.6931472
    %v1674 = vadd.f32 %v1665, %v1673
    %v1675 = vsub.f32 %v1659, %v1674
    %1676 = vst.msk [vmem:[%s7] sm:$0xff] %vm1662, %v1675
    // Predicated region
    $region38: #{mlp_forward.1} parent=1 // pred_check
      _
    $region39: #{mlp_forward.1} parent=1 // pred_check_branch
      %1678 = sbr.rel (0) target = $region41
    $region40: #{mlp_forward.1} parent=1 // pred_region
      _
    $region41: #{mlp_forward.1} parent=1 // pred_fallthru
      _
    // Predicated region
    $region42: #{mlp_forward.1} parent=1 // pred_check
      _
    $region43: #{mlp_forward.1} parent=1 // pred_check_branch
      %1680 = sbr.rel (0) target = $region45
    $region44: #{mlp_forward.1} parent=1 // pred_region
      _
    $region45: #{mlp_forward.1} parent=1 // pred_fallthru
      _
    %1681 = vsyncpa [#allocation3], 1
    %1682 = vsyncpa [#allocation5], 1

</llo_original>
